<compile_context>
chip_gen: v7x
topology: tpu7x:2x2x1
jax: 0.10.0
libtpu: 0.0.40
codegen_flags: <defaults>
</compile_context>

<pallas_src>
import jax
import jax.numpy as jnp
import numpy as np
from jax.experimental import pallas as pl
from jax.experimental.pallas import tpu as pltpu

# ----------------------------- hyperparameters ------------------------------
EMB_DIM = 16
HID_DIM = 32
ATT_DIM = 32          # Bahdanau attention dim (== hid_dim so MaxOut in_dim matches)
SEQ_LEN = 8
BATCH = 2
MAXOUT_K = 2
PAD_BATCH = 8         # pad batch to the sublane height

# bf16 weight-slab row layout (row offsets/sizes are multiples of 16 = bf16 sublane pack)
R_GATE_W = 0          # rows  0..47 : (E+H, 4H) fused [W_ih_prev.T ; W_hh.T]
R_PROJ = 48           # rows 48..79 : cols 0:A  = W_enc.T (H,A) ; cols A:2A = W_hid.T (H,A)
R_MO = 80             # rows 80..111: cols 0:2A = MaxOut ctx part (A,2A)
                      # rows 80..95 : cols 2A:4A = MaxOut prev part (E,2A)
SLAB_ROWS = 112

# f32 bias-slab row layout (8, 128)
B_GATE = 0            # (1, 4H) b_ih + b_hh
B_ATTV = 1            # (1, A)  attention v
B_MO = 2              # (1, 2A) de-interleaved MaxOut bias


# --------------------------------- kernel -----------------------------------
def _decoder_kernel(state_ref, enc_ref, w_ref, b_ref, out_ref):
    E, H, A, S, BP = EMB_DIM, HID_DIM, ATT_DIM, SEQ_LEN, PAD_BATCH

    state = state_ref[...]                       # (BP, 128) f32 = [prev | h0 | c0 | pad]
    x_cat = state[:, 0:E + H]                    # (BP, E+H) = [prev | h0]
    prev = state[:, 0:E]                         # (BP, E)
    c0 = state[:, E + H:E + 2 * H]               # (BP, H)

    # --- LSTM cell: one fused (E+H, 4H) bf16 MXU matmul, f32 accumulate ---
    gates = (jnp.dot(x_cat.astype(jnp.bfloat16),
                     w_ref[R_GATE_W:R_GATE_W + E + H, :],
                     preferred_element_type=jnp.float32)
             + b_ref[B_GATE:B_GATE + 1, :])                           # (BP, 4H) f32
    i_g = jax.nn.sigmoid(gates[:, 0 * H:1 * H])
    f_g = jax.nn.sigmoid(gates[:, 1 * H:2 * H])
    g_g = jnp.tanh(gates[:, 2 * H:3 * H])
    o_g = jax.nn.sigmoid(gates[:, 3 * H:4 * H])
    c1 = f_g * c0 + i_g * g_g
    h1 = o_g * jnp.tanh(c1)

    # --- Bahdanau attention (enc2att projection folded in-kernel) ---
    enc_flat = enc_ref[...]                      # (S*BP, H) f32, row = s*BP + b
    enc_att = jnp.dot(enc_flat.astype(jnp.bfloat16),
                      w_ref[R_PROJ:R_PROJ + H, 0:A],
                      preferred_element_type=jnp.float32)             # (S*BP, A)
    dec_att = jnp.dot(h1.astype(jnp.bfloat16),
                      w_ref[R_PROJ:R_PROJ + H, A:2 * A],
                      preferred_element_type=jnp.float32)             # (BP, A)
    att_v = b_ref[B_ATTV:B_ATTV + 1, 0:A]                             # (1, A) f32

    # unrolled over S (S=8): all ops stay 2D (no 3D reshape / relayout needed)
    score_cols = []
    for s in range(S):
        e_s = jnp.tanh(enc_att[s * BP:(s + 1) * BP, :] + dec_att)     # (BP, A)
        score_cols.append(jnp.sum(e_s * att_v, axis=-1, keepdims=True))
    scores = jnp.concatenate(score_cols, axis=1)                      # (BP, S)

    m = jnp.max(scores, axis=-1, keepdims=True)
    p = jnp.exp(scores - m)
    w_att = p / jnp.sum(p, axis=-1, keepdims=True)                    # exact normalize

    context = jnp.zeros((BP, H), jnp.float32)
    for s in range(S):
        context = context + w_att[:, s:s + 1] * enc_flat[s * BP:(s + 1) * BP, :]

    # --- dropout p=0.0 (eval mode): no-op ---

    # --- MaxOut: two MXU accumulates (no scratch round trip), de-interleaved ---
    z = (jnp.dot(context.astype(jnp.bfloat16),
                 w_ref[R_MO:R_MO + A, 0:2 * A],
                 preferred_element_type=jnp.float32)
         + jnp.dot(prev.astype(jnp.bfloat16),
                   w_ref[R_MO:R_MO + E, 2 * A:4 * A],
                   preferred_element_type=jnp.float32)
         + b_ref[B_MO:B_MO + 1, 0:2 * A])                             # (BP, 2A)
    out_mo = jnp.maximum(z[:, 0:A], z[:, A:2 * A])                    # (BP, A)

    # --- single full-width 128-lane store; layout aligned with input state ---
    pad = jnp.zeros((BP, 128 - (E + 2 * H + A + S)), jnp.float32)
    out_ref[...] = jnp.concatenate([prev, h1, c1, out_mo, w_att, pad], axis=1)


# -------------------------------- wrapper ------------------------------------
def decoder_forward(prev, hidden, enc_outs, kparams):
    """prev: (B, E); hidden: ((1, B, H), (1, B, H)); enc_outs: (S, B, H)."""
    h0, c0 = hidden
    B, E = prev.shape
    S = enc_outs.shape[0]
    H, A = HID_DIM, ATT_DIM
    BP = PAD_BATCH

    # one concat + one pad (no zeros + scatter-update chain)
    state = jnp.pad(jnp.concatenate([prev, h0[0], c0[0]], axis=1),
                    ((0, BP - B), (0, 128 - (E + 2 * H))))            # (BP, 128)

    # seq-major flat encoder outputs: row s*BP + b  (wrapper-side XLA reshape)
    enc_flat = jnp.pad(enc_outs, ((0, 0), (0, BP - B), (0, 0))).reshape(S * BP, H)

    out_slab = pl.pallas_call(
        _decoder_kernel,
        out_shape=jax.ShapeDtypeStruct((BP, 128), jnp.float32),
        grid=(1,),
        in_specs=[
            pl.BlockSpec((BP, 128), lambda i: (0, 0)),
            pl.BlockSpec((S * BP, H), lambda i: (0, 0)),
            pl.BlockSpec((SLAB_ROWS, 128), lambda i: (0, 0)),
            pl.BlockSpec((8, 128), lambda i: (0, 0)),
        ],
        out_specs=pl.BlockSpec((BP, 128), lambda i: (0, 0)),
        compiler_params=pltpu.CompilerParams(dimension_semantics=("arbitrary",)),
    )(state, enc_flat, kparams['w_slab'], kparams['b_slab'])

    # output slab layout: [prev | h1 | c1 | out | attw | pad]
    h1 = out_slab[:B, E:E + H]
    c1 = out_slab[:B, E + H:E + 2 * H]
    out = out_slab[:B, E + 2 * H:E + 2 * H + A]
    attw = out_slab[:B, E + 2 * H + A:E + 2 * H + A + S]
    return out, (h1[None, :, :], c1[None, :, :]), attw


# --------------------------- parameter construction --------------------------
def init_params(key):
    E, H, A, K = EMB_DIM, HID_DIM, ATT_DIM, MAXOUT_K
    ks = jax.random.split(key, 9)

    def u(k, shape, scale):
        return jax.random.uniform(k, shape, jnp.float32, -scale, scale)

    s_rnn = 1.0 / np.sqrt(H)
    raw = dict(
        W_ih=u(ks[0], (4 * H, E + H), s_rnn),   # LSTMCell(in_dim=E+H, H)
        W_hh=u(ks[1], (4 * H, H), s_rnn),
        b_ih=u(ks[2], (4 * H,), s_rnn),
        b_hh=u(ks[3], (4 * H,), s_rnn),
        W_enc=u(ks[4], (A, H), 1.0 / np.sqrt(H)),   # enc2att (bias-free)
        W_hid=u(ks[5], (A, H), 1.0 / np.sqrt(H)),   # hid2att (bias-free)
        att_v=u(ks[6], (A,), 1.0 / np.sqrt(A)),
        W_mo=u(ks[7], (K * A, A + E), 1.0 / np.sqrt(A + E)),  # MaxOut Linear(A+E, K*A)
        b_mo=u(ks[8], (K * A,), 1.0 / np.sqrt(A + E)),
    )

    # ---- bf16 weight slab (matmul operands only) ----
    W_ih = np.asarray(raw['W_ih'])
    W_hh = np.asarray(raw['W_hh'])
    slab = np.zeros((SLAB_ROWS, 128), np.float32)
    # fused gate weight for cat([prev, h0]) (zeros-input columns dropped entirely)
    slab[R_GATE_W:R_GATE_W + E + H, :] = np.concatenate(
        [W_ih[:, :E].T, W_hh.T], axis=0)
    slab[R_PROJ:R_PROJ + H, 0:A] = np.asarray(raw['W_enc']).T
    slab[R_PROJ:R_PROJ + H, A:2 * A] = np.asarray(raw['W_hid']).T
    # de-interleave MaxOut weight: output col c = j*K + l  ->  (j, l)
    W_mo_r = np.asarray(raw['W_mo']).reshape(A, K, A + E)
    W_de = np.concatenate([W_mo_r[:, 0, :].T, W_mo_r[:, 1, :].T], axis=1)  # (A+E, 2A)
    slab[R_MO:R_MO + A, 0:2 * A] = W_de[0:A, :]           # context part
    slab[R_MO:R_MO + E, 2 * A:4 * A] = W_de[A:A + E, :]   # prev part

    # ---- small f32 slab for biases / attention vector (VPU math stays f32) ----
    b_slab = np.zeros((8, 128), np.float32)
    b_slab[B_GATE, :] = np.asarray(raw['b_ih'] + raw['b_hh'])
    b_slab[B_ATTV, 0:A] = np.asarray(raw['att_v'])
    b_mo_r = np.asarray(raw['b_mo']).reshape(A, K)
    b_slab[B_MO, 0:A] = b_mo_r[:, 0]
    b_slab[B_MO, A:2 * A] = b_mo_r[:, 1]

    kparams = dict(w_slab=jnp.asarray(slab, dtype=jnp.bfloat16),
                   b_slab=jnp.asarray(b_slab))
    return raw, kparams


# ----------------------------- pure-JAX reference ----------------------------
def reference_forward(prev, hidden, enc_outs, raw):
    H, A, K = HID_DIM, ATT_DIM, MAXOUT_K
    h0, c0 = hidden
    B = prev.shape[0]
    hp = jax.lax.Precision.HIGHEST

    inp = jnp.concatenate([prev, jnp.zeros((B, H), jnp.float32)], axis=1)
    gates = (jnp.dot(inp, raw['W_ih'].T, precision=hp) + raw['b_ih']
             + jnp.dot(h0[0], raw['W_hh'].T, precision=hp) + raw['b_hh'])
    i_g = jax.nn.sigmoid(gates[:, 0 * H:1 * H])
    f_g = jax.nn.sigmoid(gates[:, 1 * H:2 * H])
    g_g = jnp.tanh(gates[:, 2 * H:3 * H])
    o_g = jax.nn.sigmoid(gates[:, 3 * H:4 * H])
    c1 = f_g * c0[0] + i_g * g_g
    h1 = o_g * jnp.tanh(c1)

    enc_att = jnp.einsum('sbh,ah->sba', enc_outs, raw['W_enc'], precision=hp)
    dec_att = jnp.dot(h1, raw['W_hid'].T, precision=hp)
    e = jnp.tanh(enc_att + dec_att[None, :, :])
    scores = jnp.einsum('sba,a->sb', e, raw['att_v'], precision=hp)
    w = jax.nn.softmax(scores, axis=0)                        # softmax over seq
    context = jnp.einsum('sb,sbh->bh', w, enc_outs, precision=hp)

    mo_in = jnp.concatenate([context, prev], axis=1)
    mo = jnp.dot(mo_in, raw['W_mo'].T, precision=hp) + raw['b_mo']
    out = jnp.max(mo.reshape(B, A, K), axis=2)
    return out, (h1[None], c1[None]), w.T                     # weights batch-first


# ----------------------------------- main ------------------------------------
if __name__ == "__main__":
    key = jax.random.PRNGKey(0)
    k_in, k_p = jax.random.split(key)
    k1, k2, k3, k4 = jax.random.split(k_in, 4)

    prev = jax.random.normal(k1, (BATCH, EMB_DIM), jnp.float32)
    h0 = jax.random.normal(k2, (1, BATCH, HID_DIM), jnp.float32)
    c0 = jax.random.normal(k3, (1, BATCH, HID_DIM), jnp.float32)
    enc_outs = jax.random.normal(k4, (SEQ_LEN, BATCH, HID_DIM), jnp.float32)

    raw, kparams = init_params(k_p)

    fwd = jax.jit(decoder_forward)
    out, (h1, c1), attw = fwd(prev, (h0, c0), enc_outs, kparams)
    jax.block_until_ready((out, h1, c1, attw))

    r_out, (r_h1, r_c1), r_w = reference_forward(prev, (h0, c0), enc_outs, raw)
    np.testing.assert_allclose(np.asarray(out), np.asarray(r_out), rtol=2e-2, atol=2e-2)
    np.testing.assert_allclose(np.asarray(h1), np.asarray(r_h1), rtol=2e-2, atol=2e-2)
    np.testing.assert_allclose(np.asarray(c1), np.asarray(r_c1), rtol=2e-2, atol=2e-2)
    np.testing.assert_allclose(np.asarray(attw), np.asarray(r_w), rtol=2e-2, atol=2e-2)

    print("KERNEL_OK")
</pallas_src>

<mosaic_0001>
module attributes {stable_mosaic.version = 11 : i64} {
  func.func @_decoder_kernel(%arg0: i32, %arg1: memref<8x128xf32, #tpu.memory_space<vmem>>, %arg2: memref<64x32xf32, #tpu.memory_space<vmem>>, %arg3: memref<112x128xbf16, #tpu.memory_space<vmem>>, %arg4: memref<8x128xf32, #tpu.memory_space<vmem>>, %arg5: memref<8x128xf32, #tpu.memory_space<vmem>>) attributes {dimension_semantics = [#tpu.dimension_semantics<arbitrary>], iteration_bounds = array<i64: 1>, scalar_prefetch = 0 : i64, scratch_operands = 0 : i64, tpu.core_type = #tpu.core_type<tc>, window_params = [{pipeline_mode = #tpu.pipeline_mode<synchronous>, transform_indices = @transform_0, window_bounds = array<i64: 8, 128>}, {pipeline_mode = #tpu.pipeline_mode<synchronous>, transform_indices = @transform_1, window_bounds = array<i64: 64, 32>}, {pipeline_mode = #tpu.pipeline_mode<synchronous>, transform_indices = @transform_2, window_bounds = array<i64: 112, 128>}, {pipeline_mode = #tpu.pipeline_mode<synchronous>, transform_indices = @transform_3, window_bounds = array<i64: 8, 128>}, {pipeline_mode = #tpu.pipeline_mode<synchronous>, transform_indices = @transform_4, window_bounds = array<i64: 8, 128>}]} {
    %c0 = arith.constant 0 : index
    %c0_0 = arith.constant 0 : index
    %0 = vector.load %arg1[%c0, %c0_0] : memref<8x128xf32, #tpu.memory_space<vmem>>, vector<8x128xf32>
    %1 = vector.extract_strided_slice %0 {offsets = [0, 0], sizes = [8, 48], strides = [1, 1]} : vector<8x128xf32> to vector<8x48xf32>
    %2 = vector.extract_strided_slice %0 {offsets = [0, 0], sizes = [8, 16], strides = [1, 1]} : vector<8x128xf32> to vector<8x16xf32>
    %3 = vector.extract_strided_slice %0 {offsets = [0, 48], sizes = [8, 32], strides = [1, 1]} : vector<8x128xf32> to vector<8x32xf32>
    %4 = arith.truncf %1 : vector<8x48xf32> to vector<8x48xbf16>
    %c0_1 = arith.constant 0 : index
    %c0_2 = arith.constant 0 : index
    %5 = vector.load %arg3[%c0_1, %c0_2] : memref<112x128xbf16, #tpu.memory_space<vmem>>, vector<48x128xbf16>
    %cst = arith.constant dense<0.000000e+00> : vector<8x128xf32>
    %6 = tpu.matmul %4, %5, %cst {dimension_numbers = #tpu.dot_dimension_numbers<[1], [0], [0], [1], [0, 0, 1, 1], [], []>} : vector<8x48xbf16>, vector<48x128xbf16>, vector<8x128xf32> -> vector<8x128xf32>
    %c0_3 = arith.constant 0 : index
    %c0_4 = arith.constant 0 : index
    %7 = vector.load %arg4[%c0_3, %c0_4] : memref<8x128xf32, #tpu.memory_space<vmem>>, vector<1x128xf32>
    %8 = vector.broadcast %7 : vector<1x128xf32> to vector<8x128xf32>
    %9 = arith.addf %6, %8 : vector<8x128xf32>
    %10 = vector.extract_strided_slice %9 {offsets = [0, 0], sizes = [8, 32], strides = [1, 1]} : vector<8x128xf32> to vector<8x32xf32>
    %11 = arith.negf %10 : vector<8x32xf32>
    %12 = math.exp %11 : vector<8x32xf32>
    %cst_5 = arith.constant 1.000000e+00 : f32
    %13 = vector.broadcast %cst_5 : f32 to vector<8x32xf32>
    %14 = arith.addf %13, %12 : vector<8x32xf32>
    %15 = arith.divf %13, %14 : vector<8x32xf32>
    %16 = vector.extract_strided_slice %9 {offsets = [0, 32], sizes = [8, 32], strides = [1, 1]} : vector<8x128xf32> to vector<8x32xf32>
    %17 = arith.negf %16 : vector<8x32xf32>
    %18 = math.exp %17 : vector<8x32xf32>
    %cst_6 = arith.constant 1.000000e+00 : f32
    %19 = vector.broadcast %cst_6 : f32 to vector<8x32xf32>
    %20 = arith.addf %19, %18 : vector<8x32xf32>
    %21 = arith.divf %19, %20 : vector<8x32xf32>
    %22 = vector.extract_strided_slice %9 {offsets = [0, 64], sizes = [8, 32], strides = [1, 1]} : vector<8x128xf32> to vector<8x32xf32>
    %23 = math.tanh %22 : vector<8x32xf32>
    %24 = vector.extract_strided_slice %9 {offsets = [0, 96], sizes = [8, 32], strides = [1, 1]} : vector<8x128xf32> to vector<8x32xf32>
    %25 = arith.negf %24 : vector<8x32xf32>
    %26 = math.exp %25 : vector<8x32xf32>
    %cst_7 = arith.constant 1.000000e+00 : f32
    %27 = vector.broadcast %cst_7 : f32 to vector<8x32xf32>
    %28 = arith.addf %27, %26 : vector<8x32xf32>
    %29 = arith.divf %27, %28 : vector<8x32xf32>
    %30 = arith.mulf %21, %3 : vector<8x32xf32>
    %31 = arith.mulf %15, %23 : vector<8x32xf32>
    %32 = arith.addf %30, %31 : vector<8x32xf32>
    %33 = math.tanh %32 : vector<8x32xf32>
    %34 = arith.mulf %29, %33 : vector<8x32xf32>
    %c0_8 = arith.constant 0 : index
    %c0_9 = arith.constant 0 : index
    %35 = vector.load %arg2[%c0_8, %c0_9] : memref<64x32xf32, #tpu.memory_space<vmem>>, vector<64x32xf32>
    %36 = arith.truncf %35 : vector<64x32xf32> to vector<64x32xbf16>
    %c48 = arith.constant 48 : index
    %c0_10 = arith.constant 0 : index
    %37 = vector.load %arg3[%c48, %c0_10] : memref<112x128xbf16, #tpu.memory_space<vmem>>, vector<32x32xbf16>
    %cst_11 = arith.constant dense<0.000000e+00> : vector<64x32xf32>
    %38 = tpu.matmul %36, %37, %cst_11 {dimension_numbers = #tpu.dot_dimension_numbers<[1], [0], [0], [1], [0, 0, 1, 1], [], []>} : vector<64x32xbf16>, vector<32x32xbf16>, vector<64x32xf32> -> vector<64x32xf32>
    %39 = arith.truncf %34 : vector<8x32xf32> to vector<8x32xbf16>
    %c48_12 = arith.constant 48 : index
    %c32 = arith.constant 32 : index
    %40 = vector.load %arg3[%c48_12, %c32] : memref<112x128xbf16, #tpu.memory_space<vmem>>, vector<32x32xbf16>
    %cst_13 = arith.constant dense<0.000000e+00> : vector<8x32xf32>
    %41 = tpu.matmul %39, %40, %cst_13 {dimension_numbers = #tpu.dot_dimension_numbers<[1], [0], [0], [1], [0, 0, 1, 1], [], []>} : vector<8x32xbf16>, vector<32x32xbf16>, vector<8x32xf32> -> vector<8x32xf32>
    %c1 = arith.constant 1 : index
    %c0_14 = arith.constant 0 : index
    %42 = vector.load %arg4[%c1, %c0_14] : memref<8x128xf32, #tpu.memory_space<vmem>>, vector<1x32xf32>
    %43 = vector.extract_strided_slice %38 {offsets = [0, 0], sizes = [8, 32], strides = [1, 1]} : vector<64x32xf32> to vector<8x32xf32>
    %44 = arith.addf %43, %41 : vector<8x32xf32>
    %45 = math.tanh %44 : vector<8x32xf32>
    %46 = vector.broadcast %42 : vector<1x32xf32> to vector<8x32xf32>
    %47 = arith.mulf %45, %46 : vector<8x32xf32>
    %cst_15 = arith.constant dense<0.000000e+00> : vector<8xf32>
    %48 = vector.multi_reduction <add>, %47, %cst_15 [1] : vector<8x32xf32> to vector<8xf32>
    %49 = vector.shape_cast %48 : vector<8xf32> to vector<8x1xf32>
    %50 = vector.extract_strided_slice %38 {offsets = [8, 0], sizes = [8, 32], strides = [1, 1]} : vector<64x32xf32> to vector<8x32xf32>
    %51 = arith.addf %50, %41 : vector<8x32xf32>
    %52 = math.tanh %51 : vector<8x32xf32>
    %53 = vector.broadcast %42 : vector<1x32xf32> to vector<8x32xf32>
    %54 = arith.mulf %52, %53 : vector<8x32xf32>
    %cst_16 = arith.constant dense<0.000000e+00> : vector<8xf32>
    %55 = vector.multi_reduction <add>, %54, %cst_16 [1] : vector<8x32xf32> to vector<8xf32>
    %56 = vector.shape_cast %55 : vector<8xf32> to vector<8x1xf32>
    %57 = vector.extract_strided_slice %38 {offsets = [16, 0], sizes = [8, 32], strides = [1, 1]} : vector<64x32xf32> to vector<8x32xf32>
    %58 = arith.addf %57, %41 : vector<8x32xf32>
    %59 = math.tanh %58 : vector<8x32xf32>
    %60 = vector.broadcast %42 : vector<1x32xf32> to vector<8x32xf32>
    %61 = arith.mulf %59, %60 : vector<8x32xf32>
    %cst_17 = arith.constant dense<0.000000e+00> : vector<8xf32>
    %62 = vector.multi_reduction <add>, %61, %cst_17 [1] : vector<8x32xf32> to vector<8xf32>
    %63 = vector.shape_cast %62 : vector<8xf32> to vector<8x1xf32>
    %64 = vector.extract_strided_slice %38 {offsets = [24, 0], sizes = [8, 32], strides = [1, 1]} : vector<64x32xf32> to vector<8x32xf32>
    %65 = arith.addf %64, %41 : vector<8x32xf32>
    %66 = math.tanh %65 : vector<8x32xf32>
    %67 = vector.broadcast %42 : vector<1x32xf32> to vector<8x32xf32>
    %68 = arith.mulf %66, %67 : vector<8x32xf32>
    %cst_18 = arith.constant dense<0.000000e+00> : vector<8xf32>
    %69 = vector.multi_reduction <add>, %68, %cst_18 [1] : vector<8x32xf32> to vector<8xf32>
    %70 = vector.shape_cast %69 : vector<8xf32> to vector<8x1xf32>
    %71 = vector.extract_strided_slice %38 {offsets = [32, 0], sizes = [8, 32], strides = [1, 1]} : vector<64x32xf32> to vector<8x32xf32>
    %72 = arith.addf %71, %41 : vector<8x32xf32>
    %73 = math.tanh %72 : vector<8x32xf32>
    %74 = vector.broadcast %42 : vector<1x32xf32> to vector<8x32xf32>
    %75 = arith.mulf %73, %74 : vector<8x32xf32>
    %cst_19 = arith.constant dense<0.000000e+00> : vector<8xf32>
    %76 = vector.multi_reduction <add>, %75, %cst_19 [1] : vector<8x32xf32> to vector<8xf32>
    %77 = vector.shape_cast %76 : vector<8xf32> to vector<8x1xf32>
    %78 = vector.extract_strided_slice %38 {offsets = [40, 0], sizes = [8, 32], strides = [1, 1]} : vector<64x32xf32> to vector<8x32xf32>
    %79 = arith.addf %78, %41 : vector<8x32xf32>
    %80 = math.tanh %79 : vector<8x32xf32>
    %81 = vector.broadcast %42 : vector<1x32xf32> to vector<8x32xf32>
    %82 = arith.mulf %80, %81 : vector<8x32xf32>
    %cst_20 = arith.constant dense<0.000000e+00> : vector<8xf32>
    %83 = vector.multi_reduction <add>, %82, %cst_20 [1] : vector<8x32xf32> to vector<8xf32>
    %84 = vector.shape_cast %83 : vector<8xf32> to vector<8x1xf32>
    %85 = vector.extract_strided_slice %38 {offsets = [48, 0], sizes = [8, 32], strides = [1, 1]} : vector<64x32xf32> to vector<8x32xf32>
    %86 = arith.addf %85, %41 : vector<8x32xf32>
    %87 = math.tanh %86 : vector<8x32xf32>
    %88 = vector.broadcast %42 : vector<1x32xf32> to vector<8x32xf32>
    %89 = arith.mulf %87, %88 : vector<8x32xf32>
    %cst_21 = arith.constant dense<0.000000e+00> : vector<8xf32>
    %90 = vector.multi_reduction <add>, %89, %cst_21 [1] : vector<8x32xf32> to vector<8xf32>
    %91 = vector.shape_cast %90 : vector<8xf32> to vector<8x1xf32>
    %92 = vector.extract_strided_slice %38 {offsets = [56, 0], sizes = [8, 32], strides = [1, 1]} : vector<64x32xf32> to vector<8x32xf32>
    %93 = arith.addf %92, %41 : vector<8x32xf32>
    %94 = math.tanh %93 : vector<8x32xf32>
    %95 = vector.broadcast %42 : vector<1x32xf32> to vector<8x32xf32>
    %96 = arith.mulf %94, %95 : vector<8x32xf32>
    %cst_22 = arith.constant dense<0.000000e+00> : vector<8xf32>
    %97 = vector.multi_reduction <add>, %96, %cst_22 [1] : vector<8x32xf32> to vector<8xf32>
    %98 = vector.shape_cast %97 : vector<8xf32> to vector<8x1xf32>
    %99 = tpu.concatenate %49, %56, %63, %70, %77, %84, %91, %98 in 1 : vector<8x1xf32>, vector<8x1xf32>, vector<8x1xf32>, vector<8x1xf32>, vector<8x1xf32>, vector<8x1xf32>, vector<8x1xf32>, vector<8x1xf32> -> vector<8x8xf32>
    %cst_23 = arith.constant dense<0xFF800000> : vector<8xf32>
    %100 = vector.multi_reduction <maximumf>, %99, %cst_23 [1] : vector<8x8xf32> to vector<8xf32>
    %101 = vector.shape_cast %100 : vector<8xf32> to vector<8x1xf32>
    %102 = vector.broadcast %101 : vector<8x1xf32> to vector<8x8xf32>
    %103 = arith.subf %99, %102 : vector<8x8xf32>
    %104 = math.exp %103 : vector<8x8xf32>
    %cst_24 = arith.constant dense<0.000000e+00> : vector<8xf32>
    %105 = vector.multi_reduction <add>, %104, %cst_24 [1] : vector<8x8xf32> to vector<8xf32>
    %106 = vector.shape_cast %105 : vector<8xf32> to vector<8x1xf32>
    %107 = vector.broadcast %106 : vector<8x1xf32> to vector<8x8xf32>
    %108 = arith.divf %104, %107 : vector<8x8xf32>
    %cst_25 = arith.constant 0.000000e+00 : f32
    %109 = vector.broadcast %cst_25 : f32 to vector<8x32xf32>
    %110 = vector.extract_strided_slice %108 {offsets = [0, 0], sizes = [8, 1], strides = [1, 1]} : vector<8x8xf32> to vector<8x1xf32>
    %111 = vector.extract_strided_slice %35 {offsets = [0, 0], sizes = [8, 32], strides = [1, 1]} : vector<64x32xf32> to vector<8x32xf32>
    %112 = vector.broadcast %110 : vector<8x1xf32> to vector<8x32xf32>
    %113 = arith.mulf %112, %111 : vector<8x32xf32>
    %114 = arith.addf %109, %113 : vector<8x32xf32>
    %115 = vector.extract_strided_slice %108 {offsets = [0, 1], sizes = [8, 1], strides = [1, 1]} : vector<8x8xf32> to vector<8x1xf32>
    %116 = vector.extract_strided_slice %35 {offsets = [8, 0], sizes = [8, 32], strides = [1, 1]} : vector<64x32xf32> to vector<8x32xf32>
    %117 = vector.broadcast %115 : vector<8x1xf32> to vector<8x32xf32>
    %118 = arith.mulf %117, %116 : vector<8x32xf32>
    %119 = arith.addf %114, %118 : vector<8x32xf32>
    %120 = vector.extract_strided_slice %108 {offsets = [0, 2], sizes = [8, 1], strides = [1, 1]} : vector<8x8xf32> to vector<8x1xf32>
    %121 = vector.extract_strided_slice %35 {offsets = [16, 0], sizes = [8, 32], strides = [1, 1]} : vector<64x32xf32> to vector<8x32xf32>
    %122 = vector.broadcast %120 : vector<8x1xf32> to vector<8x32xf32>
    %123 = arith.mulf %122, %121 : vector<8x32xf32>
    %124 = arith.addf %119, %123 : vector<8x32xf32>
    %125 = vector.extract_strided_slice %108 {offsets = [0, 3], sizes = [8, 1], strides = [1, 1]} : vector<8x8xf32> to vector<8x1xf32>
    %126 = vector.extract_strided_slice %35 {offsets = [24, 0], sizes = [8, 32], strides = [1, 1]} : vector<64x32xf32> to vector<8x32xf32>
    %127 = vector.broadcast %125 : vector<8x1xf32> to vector<8x32xf32>
    %128 = arith.mulf %127, %126 : vector<8x32xf32>
    %129 = arith.addf %124, %128 : vector<8x32xf32>
    %130 = vector.extract_strided_slice %108 {offsets = [0, 4], sizes = [8, 1], strides = [1, 1]} : vector<8x8xf32> to vector<8x1xf32>
    %131 = vector.extract_strided_slice %35 {offsets = [32, 0], sizes = [8, 32], strides = [1, 1]} : vector<64x32xf32> to vector<8x32xf32>
    %132 = vector.broadcast %130 : vector<8x1xf32> to vector<8x32xf32>
    %133 = arith.mulf %132, %131 : vector<8x32xf32>
    %134 = arith.addf %129, %133 : vector<8x32xf32>
    %135 = vector.extract_strided_slice %108 {offsets = [0, 5], sizes = [8, 1], strides = [1, 1]} : vector<8x8xf32> to vector<8x1xf32>
    %136 = vector.extract_strided_slice %35 {offsets = [40, 0], sizes = [8, 32], strides = [1, 1]} : vector<64x32xf32> to vector<8x32xf32>
    %137 = vector.broadcast %135 : vector<8x1xf32> to vector<8x32xf32>
    %138 = arith.mulf %137, %136 : vector<8x32xf32>
    %139 = arith.addf %134, %138 : vector<8x32xf32>
    %140 = vector.extract_strided_slice %108 {offsets = [0, 6], sizes = [8, 1], strides = [1, 1]} : vector<8x8xf32> to vector<8x1xf32>
    %141 = vector.extract_strided_slice %35 {offsets = [48, 0], sizes = [8, 32], strides = [1, 1]} : vector<64x32xf32> to vector<8x32xf32>
    %142 = vector.broadcast %140 : vector<8x1xf32> to vector<8x32xf32>
    %143 = arith.mulf %142, %141 : vector<8x32xf32>
    %144 = arith.addf %139, %143 : vector<8x32xf32>
    %145 = vector.extract_strided_slice %108 {offsets = [0, 7], sizes = [8, 1], strides = [1, 1]} : vector<8x8xf32> to vector<8x1xf32>
    %146 = vector.extract_strided_slice %35 {offsets = [56, 0], sizes = [8, 32], strides = [1, 1]} : vector<64x32xf32> to vector<8x32xf32>
    %147 = vector.broadcast %145 : vector<8x1xf32> to vector<8x32xf32>
    %148 = arith.mulf %147, %146 : vector<8x32xf32>
    %149 = arith.addf %144, %148 : vector<8x32xf32>
    %150 = arith.truncf %149 : vector<8x32xf32> to vector<8x32xbf16>
    %c80 = arith.constant 80 : index
    %c0_26 = arith.constant 0 : index
    %151 = vector.load %arg3[%c80, %c0_26] : memref<112x128xbf16, #tpu.memory_space<vmem>>, vector<32x64xbf16>
    %cst_27 = arith.constant dense<0.000000e+00> : vector<8x64xf32>
    %152 = tpu.matmul %150, %151, %cst_27 {dimension_numbers = #tpu.dot_dimension_numbers<[1], [0], [0], [1], [0, 0, 1, 1], [], []>} : vector<8x32xbf16>, vector<32x64xbf16>, vector<8x64xf32> -> vector<8x64xf32>
    %153 = arith.truncf %2 : vector<8x16xf32> to vector<8x16xbf16>
    %c80_28 = arith.constant 80 : index
    %c64 = arith.constant 64 : index
    %154 = vector.load %arg3[%c80_28, %c64] : memref<112x128xbf16, #tpu.memory_space<vmem>>, vector<16x64xbf16>
    %cst_29 = arith.constant dense<0.000000e+00> : vector<8x64xf32>
    %155 = tpu.matmul %153, %154, %cst_29 {dimension_numbers = #tpu.dot_dimension_numbers<[1], [0], [0], [1], [0, 0, 1, 1], [], []>} : vector<8x16xbf16>, vector<16x64xbf16>, vector<8x64xf32> -> vector<8x64xf32>
    %156 = arith.addf %152, %155 : vector<8x64xf32>
    %c2 = arith.constant 2 : index
    %c0_30 = arith.constant 0 : index
    %157 = vector.load %arg4[%c2, %c0_30] : memref<8x128xf32, #tpu.memory_space<vmem>>, vector<1x64xf32>
    %158 = vector.broadcast %157 : vector<1x64xf32> to vector<8x64xf32>
    %159 = arith.addf %156, %158 : vector<8x64xf32>
    %160 = vector.extract_strided_slice %159 {offsets = [0, 0], sizes = [8, 32], strides = [1, 1]} : vector<8x64xf32> to vector<8x32xf32>
    %161 = vector.extract_strided_slice %159 {offsets = [0, 32], sizes = [8, 32], strides = [1, 1]} : vector<8x64xf32> to vector<8x32xf32>
    %162 = arith.maximumf %160, %161 : vector<8x32xf32>
    %cst_31 = arith.constant 0.000000e+00 : f32
    %163 = vector.broadcast %cst_31 : f32 to vector<8x8xf32>
    %164 = tpu.concatenate %2, %34, %32, %162, %108, %163 in 1 : vector<8x16xf32>, vector<8x32xf32>, vector<8x32xf32>, vector<8x32xf32>, vector<8x8xf32>, vector<8x8xf32> -> vector<8x128xf32>
    %c0_32 = arith.constant 0 : index
    %c0_33 = arith.constant 0 : index
    %165 = vector.load %arg5[%c0_32, %c0_33] : memref<8x128xf32, #tpu.memory_space<vmem>>, vector<8x128xf32>
    tpu.vector_store %arg5[%c0_32, %c0_33], %164 {strides = array<i32>} : memref<8x128xf32, #tpu.memory_space<vmem>>, vector<8x128xf32>,
    return
  }
  func.func @transform_0(%arg0: i32) -> (i32, i32) {
    %c0_i32 = arith.constant 0 : i32
    %c0_i32_0 = arith.constant 0 : i32
    %c0_i32_1 = arith.constant 0 : i32
    return %c0_i32, %c0_i32_0 : i32, i32
  }
  func.func @transform_1(%arg0: i32) -> (i32, i32) {
    %c0_i32 = arith.constant 0 : i32
    %c0_i32_0 = arith.constant 0 : i32
    %c0_i32_1 = arith.constant 0 : i32
    return %c0_i32, %c0_i32_0 : i32, i32
  }
  func.func @transform_2(%arg0: i32) -> (i32, i32) {
    %c0_i32 = arith.constant 0 : i32
    %c0_i32_0 = arith.constant 0 : i32
    %c0_i32_1 = arith.constant 0 : i32
    return %c0_i32, %c0_i32_0 : i32, i32
  }
  func.func @transform_3(%arg0: i32) -> (i32, i32) {
    %c0_i32 = arith.constant 0 : i32
    %c0_i32_0 = arith.constant 0 : i32
    %c0_i32_1 = arith.constant 0 : i32
    return %c0_i32, %c0_i32_0 : i32, i32
  }
  func.func @transform_4(%arg0: i32) -> (i32, i32) {
    %c0_i32 = arith.constant 0 : i32
    %c0_i32_0 = arith.constant 0 : i32
    %c0_i32_1 = arith.constant 0 : i32
    return %c0_i32, %c0_i32_0 : i32, i32
  }
}

</mosaic_0001>

<llo_original>
// kernel: decoder_forward.1
$region0: #{decoder_forward.1}
  #allocation0 [shape = 'u32[]', space=smem, size = 0x4, offset = 0x4, fixed_abs, tag = 'smem constant byte address 0x4 - core index']
  #allocation1 [shape = 'u32[144,128]{1,0:T(1,128)}', space=vmem, size = 0x12000, scoped, tag = 'internal scratch']
  %s0 = inlined_call_operand.vmem [shape: f32[8,128], index: 0, kind: input, shape index: {}]
  %s1 = inlined_call_operand.vmem [shape: f32[64,32], index: 1, kind: input, shape index: {}]
  %s2 = inlined_call_operand.vmem [shape: bf16[112,128], index: 2, kind: input, shape index: {}]
  %s3 = inlined_call_operand.vmem [shape: f32[8,128], index: 3, kind: input, shape index: {}]
  %s4 = inlined_call_operand.vmem [shape: f32[8,128], index: 4, kind: output, shape index: {}]
  %s5 = sld [smem:[#allocation0]]
  $region26: #{decoder_forward.1} parent=0
    _
  %s7 = ssub.s32 1, %s5
  %s8 = scalar_select 0, %s7, %s5
  // Predicated region
  $region2: #{decoder_forward.1} parent=0 // pred_check
    _
  $region3: #{decoder_forward.1} parent=0 // pred_check_branch
    %10 = sbr.rel (0) target = $region5
  $region4: #{decoder_forward.1} parent=0 // pred_region
    _
  $region5: #{decoder_forward.1} parent=0 // pred_fallthru
    _
  // Predicated region
  $region6: #{decoder_forward.1} parent=0 // pred_check
    _
  $region7: #{decoder_forward.1} parent=0 // pred_check_branch
    %12 = sbr.rel (0) target = $region9
  $region8: #{decoder_forward.1} parent=0 // pred_region
    _
  $region9: #{decoder_forward.1} parent=0 // pred_fallthru
    _
  // Predicated region
  $region10: #{decoder_forward.1} parent=0 // pred_check
    _
  $region11: #{decoder_forward.1} parent=0 // pred_check_branch
    %14 = sbr.rel (0) target = $region13
  $region12: #{decoder_forward.1} parent=0 // pred_region
    _
  $region13: #{decoder_forward.1} parent=0 // pred_fallthru
    _
  // Predicated region
  $region14: #{decoder_forward.1} parent=0 // pred_check
    _
  $region15: #{decoder_forward.1} parent=0 // pred_check_branch
    %16 = sbr.rel (0) target = $region17
  $region16: #{decoder_forward.1} parent=0 // pred_region
    _
  $region17: #{decoder_forward.1} parent=0 // pred_fallthru
    _
  %v18 = vld [vmem:[%s0] sm:$0xff]
  %v19 = vpack.c.bf16 %v18, %v18
  %v20 = vld [vmem:[%s2] sm:$0xf]
  %v21 = vld [vmem:[%s2 + $0x4] sm:$0xf]
  %v22 = vld [vmem:[%s2 + $0x8] sm:$0xf]
  %v23 = vld [vmem:[%s2 + $0xc] sm:$0xf]
  %v24 = vld [vmem:[%s2 + $0x10] sm:$0xf]
  %v25 = vld [vmem:[%s2 + $0x14] sm:$0xf]
  %v26 = vld [vmem:[%s3] sm:$0x1]
  %v27 = vlaneseq
  %v28 = vshrl.u32 %v27, 7
  %v29 = vsub.s32 0, %v28
  %v30 = vrot.slane %v26, %v29
  %v37 = vunpack.c.l.b16 %v20
  %v38 = vunpack.c.l.b16 %v21
  %v39 = vunpack.c.l.b16 %v22
  %v40 = vunpack.c.l.b16 %v23
  %v41 = vunpack.c.l.b16 %v24
  %v42 = vunpack.c.l.b16 %v25
  %v43 = vpack.c.b16 %v38, %v37
  %v44 = vpack.c.b16 %v40, %v39
  %v45 = vpack.c.b16 %v42, %v41
  %vm49 = vcmask 392192
  %v51 = vsel %vm49, %v19, 0
  %53 = vmatprep.subr.bf16.mxu0 0
  %54 = vmatpush1.bf16.msra.mxu0 %v43
  %55 = vmatprep.subr.bf16.mxu0 0
  %56 = vmatpush1.bf16.msra.mxu0 %v44
  %57 = vmatprep.subr.bf16.mxu0 0
  %58 = vmatpush1.bf16.msra.mxu0 %v45
  %59 = vmatprep.subr.bf16.mxu0 0
  %60 = vmatpush1.bf16.msra.mxu0 0
  %61 = vmatprep.subr.bf16.mxu0 0
  %62 = vmatpush1.bf16.msra.mxu0 0
  %63 = vmatprep.subr.bf16.mxu0 0
  %64 = vmatpush1.bf16.msra.mxu0 0
  %65 = vmatprep.subr.bf16.mxu0 0
  %66 = vmatpush1.bf16.msra.mxu0 0
  %67 = vmatprep.subr.bf16.mxu0 0
  %68 = vmatpush1.bf16.msra.mxu0 0
  %69 = vmatprep.subr.bf16.mxu0 0
  %70 = vmatpush1.bf16.msra.mxu0 0
  %71 = vmatprep.subr.bf16.mxu0 0
  %72 = vmatpush1.bf16.msra.mxu0 0
  %73 = vmatprep.subr.bf16.mxu0 0
  %74 = vmatpush1.bf16.msra.mxu0 0
  %75 = vmatprep.subr.bf16.mxu0 0
  %76 = vmatpush1.bf16.msra.mxu0 0
  %77 = vmatprep.subr.bf16.mxu0 0
  %78 = vmatpush1.bf16.msra.mxu0 0
  %79 = vmatprep.subr.bf16.mxu0 0
  %80 = vmatpush1.bf16.msra.mxu0 0
  %81 = vmatprep.subr.bf16.mxu0 0
  %82 = vmatpush1.bf16.msra.mxu0 0
  %83 = vmatprep.subr.bf16.mxu0 0
  %84 = vmatpush1.bf16.msra.mxu0 0
  %85 = vmatprep.mubr.bf16.mxu0 0
  %86 = vmatmul.mubr.bf16.gmra.mrb[0].mxu0 %v51
  %v87 = vpop.f32.mrb[0].mxu0
  %v88 = vadd.f32 %v30, %v87
  %v89 = vpop.f32.mrb[0].mxu0
  %v90 = vpop.f32.mrb[0].mxu0
  %v91 = vpop.f32.mrb[0].mxu0
  %92 = vdwg.mxu0
  %v93 = vxor.u32 %v88, 2147483648
  %v94 = vmul.f32 %v93, 1.442695
  %v95 = vpow.pop %v94
  %v96 = vadd.f32 %v95, 1.0
  %v97 = vrcp.pop %v96
  %v98 = vmul.f32 1.0, %v97
  %v99 = vtanh.pop %v88
  %101 = vrot.lane.b32.xlu0 %v18, 112
  %v102 = vpop.permute.xlu0 %101
  %v104 = vmul.f32 %v98, %v102
  %106 = vrot.lane.b32.xlu0 %v99, 64
  %v107 = vpop.permute.xlu0 %106
  %v109 = vmul.f32 %v98, %v107
  %111 = vrot.lane.b32.xlu0 %v109, 32
  %v112 = vpop.permute.xlu0 %111
  %v114 = vadd.f32 %v104, %v112
  %v115 = vtanh.pop %v114
  %117 = vrot.lane.b32.xlu0 %v115, 64
  %v118 = vpop.permute.xlu0 %117
  %v120 = vmul.f32 %v98, %v118
  %v121 = vld [vmem:[%s1] sm:$0xff]
  %v122 = vld [vmem:[%s1 + $0x8] sm:$0xff]
  %v123 = vld [vmem:[%s1 + $0x10] sm:$0xff]
  %v124 = vld [vmem:[%s1 + $0x18] sm:$0xff]
  %v125 = vld [vmem:[%s1 + $0x20] sm:$0xff]
  %v126 = vld [vmem:[%s1 + $0x28] sm:$0xff]
  %v127 = vld [vmem:[%s1 + $0x30] sm:$0xff]
  %v128 = vld [vmem:[%s1 + $0x38] sm:$0xff]
  %v129 = vpack.c.bf16 %v122, %v121
  %v130 = vpack.c.bf16 %v124, %v123
  %v131 = vpack.c.bf16 %v126, %v125
  %v132 = vpack.c.bf16 %v128, %v127
  %v133 = vld [vmem:[%s2 + $0x18] sm:$0xf]
  %v134 = vld [vmem:[%s2 + $0x1c] sm:$0xf]
  %v135 = vld [vmem:[%s2 + $0x20] sm:$0xf]
  %v136 = vld [vmem:[%s2 + $0x24] sm:$0xf]
  %v141 = vunpack.c.l.b16 %v133
  %v142 = vunpack.c.l.b16 %v134
  %v143 = vunpack.c.l.b16 %v135
  %v144 = vunpack.c.l.b16 %v136
  %v145 = vpack.c.b16 %v142, %v141
  %v146 = vpack.c.b16 %v144, %v143
  %vm149 = vcmask 261120
  %v151 = vsel %vm149, %v129, 0
  %v154 = vsel %vm149, %v130, 0
  %v157 = vsel %vm149, %v131, 0
  %v160 = vsel %vm149, %v132, 0
  %162 = vmatprep.subr.bf16.mxu0 0
  %163 = vmatpush1.bf16.msra.mxu0 %v145
  %164 = vmatprep.subr.bf16.mxu0 0
  %165 = vmatpush1.bf16.msra.mxu0 %v146
  %166 = vmatprep.subr.bf16.mxu0 0
  %167 = vmatpush1.bf16.msra.mxu0 0
  %168 = vmatprep.subr.bf16.mxu0 0
  %169 = vmatpush1.bf16.msra.mxu0 0
  %170 = vmatprep.subr.bf16.mxu0 0
  %171 = vmatpush1.bf16.msra.mxu0 0
  %172 = vmatprep.subr.bf16.mxu0 0
  %173 = vmatpush1.bf16.msra.mxu0 0
  %174 = vmatprep.subr.bf16.mxu0 0
  %175 = vmatpush1.bf16.msra.mxu0 0
  %176 = vmatprep.subr.bf16.mxu0 0
  %177 = vmatpush1.bf16.msra.mxu0 0
  %178 = vmatprep.subr.bf16.mxu0 0
  %179 = vmatpush1.bf16.msra.mxu0 0
  %180 = vmatprep.subr.bf16.mxu0 0
  %181 = vmatpush1.bf16.msra.mxu0 0
  %182 = vmatprep.subr.bf16.mxu0 0
  %183 = vmatpush1.bf16.msra.mxu0 0
  %184 = vmatprep.subr.bf16.mxu0 0
  %185 = vmatpush1.bf16.msra.mxu0 0
  %186 = vmatprep.subr.bf16.mxu0 0
  %187 = vmatpush1.bf16.msra.mxu0 0
  %188 = vmatprep.subr.bf16.mxu0 0
  %189 = vmatpush1.bf16.msra.mxu0 0
  %190 = vmatprep.subr.bf16.mxu0 0
  %191 = vmatpush1.bf16.msra.mxu0 0
  %192 = vmatprep.subr.bf16.mxu0 0
  %193 = vmatpush1.bf16.msra.mxu0 0
  %194 = vmatprep.mubr.bf16.mxu0 0
  %195 = vmatmul.mubr.bf16.gmra.mrb[0].mxu0 %v151
  %v196 = vpop.f32.mrb[0].mxu0
  %v197 = vadd.f32 0.0, %v196
  %v198 = vpop.f32.mrb[0].mxu0
  %v199 = vpop.f32.mrb[0].mxu0
  %v200 = vadd.f32 0.0, %v199
  %v201 = vpop.f32.mrb[0].mxu0
  %202 = vmatprep.mubr.bf16.mxu0 0
  %203 = vmatmul.mubr.bf16.gmra.mrb[0].mxu0 %v154
  %v204 = vpop.f32.mrb[0].mxu0
  %v205 = vadd.f32 0.0, %v204
  %v206 = vpop.f32.mrb[0].mxu0
  %v207 = vpop.f32.mrb[0].mxu0
  %v208 = vadd.f32 0.0, %v207
  %v209 = vpop.f32.mrb[0].mxu0
  %210 = vmatprep.mubr.bf16.mxu0 0
  %211 = vmatmul.mubr.bf16.gmra.mrb[0].mxu0 %v157
  %v212 = vpop.f32.mrb[0].mxu0
  %v213 = vadd.f32 0.0, %v212
  %v214 = vpop.f32.mrb[0].mxu0
  %v215 = vpop.f32.mrb[0].mxu0
  %v216 = vadd.f32 0.0, %v215
  %v217 = vpop.f32.mrb[0].mxu0
  %218 = vmatprep.mubr.bf16.mxu0 0
  %219 = vmatmul.mubr.bf16.gmra.mrb[0].mxu0 %v160
  %v220 = vpop.f32.mrb[0].mxu0
  %v221 = vadd.f32 0.0, %v220
  %v222 = vpop.f32.mrb[0].mxu0
  %v223 = vpop.f32.mrb[0].mxu0
  %v224 = vadd.f32 0.0, %v223
  %v225 = vpop.f32.mrb[0].mxu0
  %226 = vdwg.mxu0
  %v227 = vpack.c.bf16 %v120, %v120
  %229 = vrot.lane.b32.xlu0 %v227, 32
  %v230 = vpop.permute.xlu0 %229
  %231 = vrot.lane.b32.xlu0 %v145, 96
  %v232 = vpop.permute.xlu0 %231
  %233 = vrot.lane.b32.xlu0 %v146, 96
  %v234 = vpop.permute.xlu0 %233
  %v238 = vsel %vm149, %v230, 0
  %240 = vmatprep.subr.bf16.mxu0 0
  %241 = vmatpush1.bf16.msra.mxu0 %v232
  %242 = vmatprep.subr.bf16.mxu0 0
  %243 = vmatpush1.bf16.msra.mxu0 %v234
  %244 = vmatprep.subr.bf16.mxu0 0
  %245 = vmatpush1.bf16.msra.mxu0 0
  %246 = vmatprep.subr.bf16.mxu0 0
  %247 = vmatpush1.bf16.msra.mxu0 0
  %248 = vmatprep.subr.bf16.mxu0 0
  %249 = vmatpush1.bf16.msra.mxu0 0
  %250 = vmatprep.subr.bf16.mxu0 0
  %251 = vmatpush1.bf16.msra.mxu0 0
  %252 = vmatprep.subr.bf16.mxu0 0
  %253 = vmatpush1.bf16.msra.mxu0 0
  %254 = vmatprep.subr.bf16.mxu0 0
  %255 = vmatpush1.bf16.msra.mxu0 0
  %256 = vmatprep.subr.bf16.mxu0 0
  %257 = vmatpush1.bf16.msra.mxu0 0
  %258 = vmatprep.subr.bf16.mxu0 0
  %259 = vmatpush1.bf16.msra.mxu0 0
  %260 = vmatprep.subr.bf16.mxu0 0
  %261 = vmatpush1.bf16.msra.mxu0 0
  %262 = vmatprep.subr.bf16.mxu0 0
  %263 = vmatpush1.bf16.msra.mxu0 0
  %264 = vmatprep.subr.bf16.mxu0 0
  %265 = vmatpush1.bf16.msra.mxu0 0
  %266 = vmatprep.subr.bf16.mxu0 0
  %267 = vmatpush1.bf16.msra.mxu0 0
  %268 = vmatprep.subr.bf16.mxu0 0
  %269 = vmatpush1.bf16.msra.mxu0 0
  %270 = vmatprep.subr.bf16.mxu0 0
  %271 = vmatpush1.bf16.msra.mxu0 0
  %272 = vmatprep.mubr.bf16.mxu0 0
  %273 = vmatmul.mubr.bf16.gmra.mrb[0].mxu0 %v238
  %v274 = vpop.f32.mrb[0].mxu0
  %v275 = vadd.f32 0.0, %v274
  %v276 = vpop.f32.mrb[0].mxu0
  %v277 = vpop.f32.mrb[0].mxu0
  %v278 = vpop.f32.mrb[0].mxu0
  %279 = vdwg.mxu0
  %v280 = vld [vmem:[%s3 + $0x1] sm:$0x1]
  %v281 = vadd.f32 %v197, %v275
  %v282 = vtanh.pop %v281
  %v283 = vlaneseq
  %v284 = vshrl.u32 %v283, 7
  %v285 = vsub.s32 0, %v284
  %v286 = vrot.slane %v280, %v285
  %v287 = vmul.f32 %v282, %v286
  %v288 = vsel %vm149, %v287, 0.0
  %289 = vadd.xlane.f32.xlu0 %v288
  %v290 = vpop.xlane.xlu0 %289
  %v291 = vadd.f32 %v200, %v275
  %v292 = vtanh.pop %v291
  %v293 = vmul.f32 %v292, %v286
  %v294 = vsel %vm149, %v293, 0.0
  %295 = vadd.xlane.f32.xlu0 %v294
  %v296 = vpop.xlane.xlu0 %295
  %v297 = vadd.f32 %v205, %v275
  %v298 = vtanh.pop %v297
  %v299 = vmul.f32 %v298, %v286
  %v300 = vsel %vm149, %v299, 0.0
  %301 = vadd.xlane.f32.xlu0 %v300
  %v302 = vpop.xlane.xlu0 %301
  %v303 = vadd.f32 %v208, %v275
  %v304 = vtanh.pop %v303
  %v305 = vmul.f32 %v304, %v286
  %v306 = vsel %vm149, %v305, 0.0
  %307 = vadd.xlane.f32.xlu0 %v306
  %v308 = vpop.xlane.xlu0 %307
  %v309 = vadd.f32 %v213, %v275
  %v310 = vtanh.pop %v309
  %v311 = vmul.f32 %v310, %v286
  %v312 = vsel %vm149, %v311, 0.0
  %313 = vadd.xlane.f32.xlu0 %v312
  %v314 = vpop.xlane.xlu0 %313
  %v315 = vadd.f32 %v216, %v275
  %v316 = vtanh.pop %v315
  %v317 = vmul.f32 %v316, %v286
  %v318 = vsel %vm149, %v317, 0.0
  %319 = vadd.xlane.f32.xlu0 %v318
  %v320 = vpop.xlane.xlu0 %319
  %v321 = vadd.f32 %v221, %v275
  %v322 = vtanh.pop %v321
  %v323 = vmul.f32 %v322, %v286
  %v324 = vsel %vm149, %v323, 0.0
  %325 = vadd.xlane.f32.xlu0 %v324
  %v326 = vpop.xlane.xlu0 %325
  %v327 = vadd.f32 %v224, %v275
  %v328 = vtanh.pop %v327
  %v329 = vmul.f32 %v328, %v286
  %v330 = vsel %vm149, %v329, 0.0
  %331 = vadd.xlane.f32.xlu0 %v330
  %v332 = vpop.xlane.xlu0 %331
  %vm333 = vcmask 7168
  %v334 = vsel %vm333, %v290, %v296
  %vm335 = vcmask 15360
  %v336 = vsel %vm335, %v334, %v302
  %vm337 = vcmask 23552
  %v338 = vsel %vm337, %v336, %v308
  %vm339 = vcmask 31744
  %v340 = vsel %vm339, %v338, %v314
  %vm341 = vcmask 39936
  %v342 = vsel %vm341, %v340, %v320
  %vm343 = vcmask 48128
  %v344 = vsel %vm343, %v342, %v326
  %vm345 = vcmask 56320
  %v346 = vsel %vm345, %v344, %v332
  %vm347 = vcmask 64512
  %v348 = vsel %vm347, %v346, -inf
  %349 = vmax.xlane.f32.xlu0 %v348
  %v350 = vpop.xlane.xlu0 %349
  %v351 = vsub.f32 %v346, %v350
  %v352 = vmul.f32 %v351, 1.442695
  %v353 = vpow.pop %v352
  %v354 = vsel %vm347, %v353, 0.0
  %355 = vadd.xlane.f32.xlu0 %v354
  %v356 = vpop.xlane.xlu0 %355
  %v357 = vrcp.pop %v356
  %v358 = vmul.f32 %v353, %v357
  %360 = vset.pattern.permute.xlu0 0
  %361 = vperm.xlu0 %360, %v358
  %v362 = vpop.permute.xlu0 %361
  %v364 = vmul.f32 %v362, %v121
  %v365 = vadd.f32 %v364, 0.0
  %366 = vset.pattern.permute.xlu0 1
  %367 = vperm.xlu0 %366, %v358
  %v368 = vpop.permute.xlu0 %367
  %v370 = vmul.f32 %v368, %v122
  %v371 = vadd.f32 %v365, %v370
  %372 = vset.pattern.permute.xlu0 2
  %373 = vperm.xlu0 %372, %v358
  %v374 = vpop.permute.xlu0 %373
  %v376 = vmul.f32 %v374, %v123
  %v377 = vadd.f32 %v371, %v376
  %378 = vset.pattern.permute.xlu0 3
  %379 = vperm.xlu0 %378, %v358
  %v380 = vpop.permute.xlu0 %379
  %v382 = vmul.f32 %v380, %v124
  %v383 = vadd.f32 %v377, %v382
  %384 = vset.pattern.permute.xlu0 4
  %385 = vperm.xlu0 %384, %v358
  %v386 = vpop.permute.xlu0 %385
  %v388 = vmul.f32 %v386, %v125
  %v389 = vadd.f32 %v383, %v388
  %390 = vset.pattern.permute.xlu0 5
  %391 = vperm.xlu0 %390, %v358
  %v392 = vpop.permute.xlu0 %391
  %v394 = vmul.f32 %v392, %v126
  %v395 = vadd.f32 %v389, %v394
  %396 = vset.pattern.permute.xlu0 6
  %397 = vperm.xlu0 %396, %v358
  %v398 = vpop.permute.xlu0 %397
  %v400 = vmul.f32 %v398, %v127
  %v401 = vadd.f32 %v395, %v400
  %402 = vset.pattern.permute.xlu0 7
  %403 = vperm.xlu0 %402, %v358
  %v404 = vpop.permute.xlu0 %403
  %v406 = vmul.f32 %v404, %v128
  %v407 = vadd.f32 %v401, %v406
  %v408 = vpack.c.bf16 %v407, %v407
  %v409 = vld [vmem:[%s2 + $0x28] sm:$0xf]
  %v410 = vld [vmem:[%s2 + $0x2c] sm:$0xf]
  %v411 = vld [vmem:[%s2 + $0x30] sm:$0xf]
  %v412 = vld [vmem:[%s2 + $0x34] sm:$0xf]
  %v413 = vld [vmem:[%s2 + $0x28] sm:$0xf]
  %v414 = vld [vmem:[%s2 + $0x2c] sm:$0xf]
  %v417 = vunpack.c.l.b16 %v413
  %v418 = vunpack.c.l.b16 %v414
  %v419 = vpack.c.b16 %v418, %v417
  %420 = vrot.lane.b32.xlu0 %v419, 64
  %v421 = vpop.permute.xlu0 %420
  %vm423 = vcmask 130048
  %v424 = vsel %vm423, %v19, 0
  %426 = vmatprep.subr.bf16.mxu0 0
  %427 = vmatpush1.bf16.msra.mxu0 %v421
  %428 = vmatprep.subr.bf16.mxu0 0
  %429 = vmatpush1.bf16.msra.mxu0 0
  %430 = vmatprep.subr.bf16.mxu0 0
  %431 = vmatpush1.bf16.msra.mxu0 0
  %432 = vmatprep.subr.bf16.mxu0 0
  %433 = vmatpush1.bf16.msra.mxu0 0
  %434 = vmatprep.subr.bf16.mxu0 0
  %435 = vmatpush1.bf16.msra.mxu0 0
  %436 = vmatprep.subr.bf16.mxu0 0
  %437 = vmatpush1.bf16.msra.mxu0 0
  %438 = vmatprep.subr.bf16.mxu0 0
  %439 = vmatpush1.bf16.msra.mxu0 0
  %440 = vmatprep.subr.bf16.mxu0 0
  %441 = vmatpush1.bf16.msra.mxu0 0
  %442 = vmatprep.subr.bf16.mxu0 0
  %443 = vmatpush1.bf16.msra.mxu0 0
  %444 = vmatprep.subr.bf16.mxu0 0
  %445 = vmatpush1.bf16.msra.mxu0 0
  %446 = vmatprep.subr.bf16.mxu0 0
  %447 = vmatpush1.bf16.msra.mxu0 0
  %448 = vmatprep.subr.bf16.mxu0 0
  %449 = vmatpush1.bf16.msra.mxu0 0
  %450 = vmatprep.subr.bf16.mxu0 0
  %451 = vmatpush1.bf16.msra.mxu0 0
  %452 = vmatprep.subr.bf16.mxu0 0
  %453 = vmatpush1.bf16.msra.mxu0 0
  %454 = vmatprep.subr.bf16.mxu0 0
  %455 = vmatpush1.bf16.msra.mxu0 0
  %456 = vmatprep.subr.bf16.mxu0 0
  %457 = vmatpush1.bf16.msra.mxu0 0
  %458 = vmatprep.mubr.bf16.mxu0 0
  %459 = vmatmul.mubr.bf16.gmra.mrb[0].mxu0 %v424
  %v460 = vpop.f32.mrb[0].mxu0
  %v461 = vadd.f32 0.0, %v460
  %v462 = vpop.f32.mrb[0].mxu0
  %v463 = vpop.f32.mrb[0].mxu0
  %v464 = vpop.f32.mrb[0].mxu0
  %465 = vdwg.mxu0
  %v470 = vunpack.c.l.b16 %v409
  %v471 = vunpack.c.l.b16 %v410
  %v472 = vunpack.c.l.b16 %v411
  %v473 = vunpack.c.l.b16 %v412
  %v474 = vpack.c.b16 %v471, %v470
  %v475 = vpack.c.b16 %v473, %v472
  %v479 = vsel %vm149, %v408, 0
  %481 = vmatprep.subr.bf16.mxu0 0
  %482 = vmatpush1.bf16.msra.mxu0 %v474
  %483 = vmatprep.subr.bf16.mxu0 0
  %484 = vmatpush1.bf16.msra.mxu0 %v475
  %485 = vmatprep.subr.bf16.mxu0 0
  %486 = vmatpush1.bf16.msra.mxu0 0
  %487 = vmatprep.subr.bf16.mxu0 0
  %488 = vmatpush1.bf16.msra.mxu0 0
  %489 = vmatprep.subr.bf16.mxu0 0
  %490 = vmatpush1.bf16.msra.mxu0 0
  %491 = vmatprep.subr.bf16.mxu0 0
  %492 = vmatpush1.bf16.msra.mxu0 0
  %493 = vmatprep.subr.bf16.mxu0 0
  %494 = vmatpush1.bf16.msra.mxu0 0
  %495 = vmatprep.subr.bf16.mxu0 0
  %496 = vmatpush1.bf16.msra.mxu0 0
  %497 = vmatprep.subr.bf16.mxu0 0
  %498 = vmatpush1.bf16.msra.mxu0 0
  %499 = vmatprep.subr.bf16.mxu0 0
  %500 = vmatpush1.bf16.msra.mxu0 0
  %501 = vmatprep.subr.bf16.mxu0 0
  %502 = vmatpush1.bf16.msra.mxu0 0
  %503 = vmatprep.subr.bf16.mxu0 0
  %504 = vmatpush1.bf16.msra.mxu0 0
  %505 = vmatprep.subr.bf16.mxu0 0
  %506 = vmatpush1.bf16.msra.mxu0 0
  %507 = vmatprep.subr.bf16.mxu0 0
  %508 = vmatpush1.bf16.msra.mxu0 0
  %509 = vmatprep.subr.bf16.mxu0 0
  %510 = vmatpush1.bf16.msra.mxu0 0
  %511 = vmatprep.subr.bf16.mxu0 0
  %512 = vmatpush1.bf16.msra.mxu0 0
  %513 = vmatprep.mubr.bf16.mxu0 0
  %514 = vmatmul.mubr.bf16.gmra.mrb[0].mxu0 %v479
  %v515 = vpop.f32.mrb[0].mxu0
  %v516 = vadd.f32 %v461, %v515
  %v517 = vpop.f32.mrb[0].mxu0
  %v518 = vpop.f32.mrb[0].mxu0
  %v519 = vpop.f32.mrb[0].mxu0
  %520 = vdwg.mxu0
  %v521 = vld [vmem:[%s3 + $0x2] sm:$0x1]
  %v522 = vlaneseq
  %v523 = vshrl.u32 %v522, 7
  %v524 = vsub.s32 0, %v523
  %v525 = vrot.slane %v521, %v524
  %v526 = vadd.f32 %v516, %v525
  %528 = vrot.lane.b32.xlu0 %v526, 96
  %v529 = vpop.permute.xlu0 %528
  %v531 = vmax.f32 %v526, %v529
  %533 = vrot.lane.b32.xlu0 %v120, 48
  %v534 = vpop.permute.xlu0 %533
  %537 = vrot.lane.b32.xlu0 %v114, 16
  %v538 = vpop.permute.xlu0 %537
  %541 = vrot.lane.b32.xlu0 %v531, 80
  %v542 = vpop.permute.xlu0 %541
  %544 = vrot.lane.b32.xlu0 %v358, 112
  %v545 = vpop.permute.xlu0 %544
  %v547 = vsel %vm423, %v18, %v534
  %v548 = vsel %vm49, %v547, %v538
  %vm549 = vcmask 654336
  %v550 = vsel %vm549, %v548, %v542
  %vm551 = vcmask 916480
  %v552 = vsel %vm551, %v550, %v545
  %vm553 = vcmask 982016
  %v554 = vsel %vm553, %v552, 0.0
  %555 = vst [vmem:[%s4] sm:$0xff] %v554
  // Predicated region
  $region18: #{decoder_forward.1} parent=0 // pred_check
    _
  $region19: #{decoder_forward.1} parent=0 // pred_check_branch
    %557 = sbr.rel (0) target = $region21
  $region20: #{decoder_forward.1} parent=0 // pred_region
    _
  $region21: #{decoder_forward.1} parent=0 // pred_fallthru
    _
  // Predicated region
  $region22: #{decoder_forward.1} parent=0 // pred_check
    _
  $region23: #{decoder_forward.1} parent=0 // pred_check_branch
    %559 = sbr.rel (0) target = $region25
  $region24: #{decoder_forward.1} parent=0 // pred_region
    _
  $region25: #{decoder_forward.1} parent=0 // pred_fallthru
    _

</llo_original>
